<compile_context>
chip_gen: v7x
topology: tpu7x:2x2x1
jax: 0.10.0
libtpu: 0.0.40
codegen_flags: <defaults>
</compile_context>

<pallas_src>
import functools
import math

import jax
import jax.numpy as jnp
from jax import lax
from jax.experimental import pallas as pl
from jax.experimental.pallas import tpu as pltpu


def _cdiv(a, b):
    return (a + b - 1) // b


def _round_up(a, b):
    return _cdiv(a, b) * b


def _first_repr_kernel(x_ref, w_ref, b_ref, out_ref, *, eps):
    """One grid step == one (Tm, D) slab of rows: fused RMSNorm + Linear (+ eval dropout)."""
    x = x_ref[...]                                    # (Tm, D) f32
    # RMSNorm (gamma already folded into the weight): x * rsqrt(mean(x^2, -1) + eps)
    ms = jnp.mean(x * x, axis=-1, keepdims=True)      # (Tm, 1) cross-lane reduce (XLU)
    inv = lax.rsqrt(ms + eps)                         # EUP slot (free alongside VPU work)
    y = x * inv                                       # (Tm, D) single VPU pass
    # Linear: y @ W_eff + b — MXU in the weight's dtype (bf16 default), f32 accumulation.
    out = jnp.dot(y.astype(w_ref.dtype), w_ref[...],
                  preferred_element_type=jnp.float32) + b_ref[...]
    # Dropout: eval-mode identity.
    # TODO(synk): training-mode dropout (random masking) is not implemented.
    out_ref[...] = out.astype(out_ref.dtype)


def fold_gamma_into_weight(gamma, w, mxu_dtype=jnp.bfloat16):
    """One-time constant transform: RMSNorm gamma folded into the linear weight.

    gamma: (D,), w: (D, F) (== PyTorch linear.weight.T). Returns (gamma[:, None] * w)
    stored in the MXU dtype (bf16 by default -> halves weight DMA/VMEM footprint).
    """
    w_eff = gamma.astype(jnp.float32)[:, None] * w.astype(jnp.float32)
    return w_eff.astype(mxu_dtype)


def first_representation_forward(x, w_eff, b, *, eps=1e-6, block_m=None, out_dtype=None):
    """x: (..., D); w_eff: (D, F) gamma-folded weight (bf16 or f32); b: (F,)."""
    *lead, D = x.shape
    F = w_eff.shape[1]
    out_dtype = x.dtype if out_dtype is None else out_dtype

    # Fold all leading dims into one row axis M (fills MXU rows, one big matmul per tile).
    M = 1
    for d in lead:
        M *= d
    x2 = x.reshape(M, D)          # metadata-only reshape, no HBM traffic

    # Row-tile heuristic from a conservative VMEM budget (safe on v7x's 64 MiB VMEM):
    # double-buffered x/out tiles + the (double-buffered, resident) weight and bias.
    # TODO(synk): for very large D*F the weight itself should be tiled over F/K axes.
    if block_m is None:
        w_item = jnp.dtype(w_eff.dtype).itemsize
        fixed_bytes = 2 * (D * F * w_item + F * 4)    # resident weight + bias (double-buffered)
        per_row_bytes = 2 * 4 * (D + F)               # x tile + out tile (double-buffered, f32)
        budget = 24 * 1024 * 1024
        rows = max(8, (budget - fixed_bytes) // per_row_bytes)
        block_m = int(min(1024, max(8, (rows // 8) * 8)))
        # Give both TensorCores work on dual-TC chips (v7x) once there is more than one tile
        # worth of rows; a single-step "parallel" grid would idle half the chip.
        if M > 8 and _cdiv(M, block_m) < 2:
            block_m = _round_up(_cdiv(M, 2), 8)
        block_m = min(block_m, _round_up(M, 8))

    grid_m = _cdiv(M, block_m)    # partial last block handled by Pallas (no jnp.pad pass)

    out = pl.pallas_call(
        functools.partial(_first_repr_kernel, eps=eps),
        out_shape=jax.ShapeDtypeStruct((M, F), out_dtype),
        grid_spec=pltpu.PrefetchScalarGridSpec(
            num_scalar_prefetch=0,
            grid=(grid_m,),
            in_specs=[
                pl.BlockSpec((block_m, D), lambda i: (i, 0)),   # x rows (partial last block OK)
                pl.BlockSpec((D, F), lambda i: (0, 0)),         # gamma-folded weight (resident)
                pl.BlockSpec((1, F), lambda i: (0, 0)),         # bias (resident)
            ],
            out_specs=pl.BlockSpec((block_m, F), lambda i: (i, 0)),
        ),
        compiler_params=pltpu.CompilerParams(
            dimension_semantics=("parallel",),          # shards row tiles across TensorCores
            vmem_limit_bytes=64 * 1024 * 1024,          # v5e default scoped limit is only 16 MiB
        ),
    )(x2, w_eff, b.reshape(1, F).astype(jnp.float32))

    return out.reshape(*lead, F)


def first_representation_reference(x, gamma, w, b, *, eps=1e-6):
    """Pure-JAX reference mirroring the PyTorch module exactly (eval mode, f32)."""
    ms = jnp.mean(x * x, axis=-1, keepdims=True)
    y = x * lax.rsqrt(ms + eps) * gamma
    return y @ w + b


if __name__ == "__main__":
    # Module hyperparams: d_model=16 -> D = 2*d_model = 32; d_features=64 -> F = d_features//2 = 32.
    d_model, d_features, dropout = 16, 64, 0.0
    D = 2 * d_model
    F = d_features // 2
    B, S = 2, 8

    key = jax.random.PRNGKey(0)
    kx, kg, kw, kb = jax.random.split(key, 4)

    x = jax.random.normal(kx, (B, S, D), dtype=jnp.float32)

    # gamma is initialized to ones in the module; use non-trivial values for a stronger check.
    gamma = 1.0 + 0.1 * jax.random.normal(kg, (D,), dtype=jnp.float32)

    # nn.Linear default init; stored as (d_in, d_out) == PyTorch weight.T
    bound = 1.0 / math.sqrt(D)
    w = jax.random.uniform(kw, (D, F), jnp.float32, -bound, bound)
    b = jax.random.uniform(kb, (F,), jnp.float32, -bound, bound)

    ref = first_representation_reference(x, gamma, w, b, eps=1e-6)

    # f32-MXU path: matches the pure-JAX reference tightly.
    w_f32 = fold_gamma_into_weight(gamma, w, mxu_dtype=jnp.float32)
    out_f32 = jax.block_until_ready(first_representation_forward(x, w_f32, b, eps=1e-6))
    assert out_f32.shape == (B, S, F), out_f32.shape
    assert jnp.allclose(out_f32, ref, atol=1e-5, rtol=1e-5), \
        float(jnp.max(jnp.abs(out_f32 - ref)))

    # bf16-MXU / f32-accumulate path (the recommended fast path): loose tolerance.
    w_bf16 = fold_gamma_into_weight(gamma, w, mxu_dtype=jnp.bfloat16)
    out_bf16 = jax.block_until_ready(first_representation_forward(x, w_bf16, b, eps=1e-6))
    assert out_bf16.shape == (B, S, F), out_bf16.shape
    assert jnp.allclose(out_bf16, ref, atol=3e-2, rtol=3e-2), \
        float(jnp.max(jnp.abs(out_bf16 - ref)))

    print("KERNEL_OK")
</pallas_src>

<mosaic_0001>
module attributes {stable_mosaic.version = 11 : i64} {
  func.func @_first_repr_kernel(%arg0: i32, %arg1: memref<8x32xf32, #tpu.memory_space<vmem>>, %arg2: memref<32x32xf32, #tpu.memory_space<vmem>>, %arg3: memref<1x32xf32, #tpu.memory_space<vmem>>, %arg4: memref<8x32xf32, #tpu.memory_space<vmem>>) attributes {dimension_semantics = [#tpu.dimension_semantics<parallel>], iteration_bounds = array<i64: 2>, scalar_prefetch = 0 : i64, scratch_operands = 0 : i64, tpu.core_type = #tpu.core_type<tc>, window_params = [{transform_indices = @transform_0, window_bounds = array<i64: 8, 32>}, {pipeline_mode = #tpu.pipeline_mode<synchronous>, transform_indices = @transform_1, window_bounds = array<i64: 32, 32>}, {pipeline_mode = #tpu.pipeline_mode<synchronous>, transform_indices = @transform_2, window_bounds = array<i64: 1, 32>}, {transform_indices = @transform_3, window_bounds = array<i64: 8, 32>}]} {
    %c0 = arith.constant 0 : index
    %c0_0 = arith.constant 0 : index
    %0 = vector.load %arg1[%c0, %c0_0] : memref<8x32xf32, #tpu.memory_space<vmem>>, vector<8x32xf32>
    %1 = arith.mulf %0, %0 : vector<8x32xf32>
    %cst = arith.constant dense<0.000000e+00> : vector<8xf32>
    %2 = vector.multi_reduction <add>, %1, %cst [1] : vector<8x32xf32> to vector<8xf32>
    %3 = vector.shape_cast %2 : vector<8xf32> to vector<8x1xf32>
    %cst_1 = arith.constant 3.200000e+01 : f32
    %4 = vector.broadcast %cst_1 : f32 to vector<8x1xf32>
    %5 = arith.divf %3, %4 : vector<8x1xf32>
    %cst_2 = arith.constant 9.99999997E-7 : f32
    %6 = vector.broadcast %cst_2 : f32 to vector<8x1xf32>
    %7 = arith.addf %5, %6 : vector<8x1xf32>
    %8 = math.rsqrt %7 : vector<8x1xf32>
    %9 = vector.broadcast %8 : vector<8x1xf32> to vector<8x32xf32>
    %10 = arith.mulf %0, %9 : vector<8x32xf32>
    %c0_3 = arith.constant 0 : index
    %c0_4 = arith.constant 0 : index
    %11 = vector.load %arg2[%c0_3, %c0_4] : memref<32x32xf32, #tpu.memory_space<vmem>>, vector<32x32xf32>
    %cst_5 = arith.constant dense<0.000000e+00> : vector<8x32xf32>
    %12 = tpu.matmul %10, %11, %cst_5 {dimension_numbers = #tpu.dot_dimension_numbers<[1], [0], [0], [1], [0, 0, 1, 1], [], []>} : vector<8x32xf32>, vector<32x32xf32>, vector<8x32xf32> -> vector<8x32xf32>
    %c0_6 = arith.constant 0 : index
    %c0_7 = arith.constant 0 : index
    %13 = vector.load %arg3[%c0_6, %c0_7] : memref<1x32xf32, #tpu.memory_space<vmem>>, vector<1x32xf32>
    %14 = vector.broadcast %13 : vector<1x32xf32> to vector<8x32xf32>
    %15 = arith.addf %12, %14 : vector<8x32xf32>
    %c0_8 = arith.constant 0 : index
    %c0_9 = arith.constant 0 : index
    %16 = vector.load %arg4[%c0_8, %c0_9] : memref<8x32xf32, #tpu.memory_space<vmem>>, vector<8x32xf32>
    tpu.vector_store %arg4[%c0_8, %c0_9], %15 {strides = array<i32>} : memref<8x32xf32, #tpu.memory_space<vmem>>, vector<8x32xf32>,
    return
  }
  func.func @transform_0(%arg0: i32) -> (i32, i32) {
    %c0_i32 = arith.constant 0 : i32
    %c0_i32_0 = arith.constant 0 : i32
    return %arg0, %c0_i32 : i32, i32
  }
  func.func @transform_1(%arg0: i32) -> (i32, i32) {
    %c0_i32 = arith.constant 0 : i32
    %c0_i32_0 = arith.constant 0 : i32
    %c0_i32_1 = arith.constant 0 : i32
    return %c0_i32, %c0_i32_0 : i32, i32
  }
  func.func @transform_2(%arg0: i32) -> (i32, i32) {
    %c0_i32 = arith.constant 0 : i32
    %c0_i32_0 = arith.constant 0 : i32
    %c0_i32_1 = arith.constant 0 : i32
    return %c0_i32, %c0_i32_0 : i32, i32
  }
  func.func @transform_3(%arg0: i32) -> (i32, i32) {
    %c0_i32 = arith.constant 0 : i32
    %c0_i32_0 = arith.constant 0 : i32
    return %arg0, %c0_i32 : i32, i32
  }
}

</mosaic_0001>

<llo_original>
// kernel: tpu_custom_call.1
$region0: #{tpu_custom_call.1}
  #allocation0 [shape = 'u32[]', space=smem, size = 0x4, offset = 0x4, fixed_abs, tag = 'smem constant byte address 0x4 - core index']
  #allocation1 [shape = 'u32[144,128]{1,0:T(1,128)}', space=vmem, size = 0x12000, scoped, tag = 'internal scratch']
  %s0 = inlined_call_operand.hbm [shape: f32[16,32], index: 0, kind: input, shape index: {}]
  %s1 = inlined_call_operand.hbm [shape: f32[32,32], index: 1, kind: input, shape index: {}]
  %s2 = inlined_call_operand.hbm [shape: f32[1,32], index: 2, kind: input, shape index: {}]
  %s3 = inlined_call_operand.hbm [shape: f32[16,32], index: 3, kind: output, shape index: {}]
  %s4 = sld [smem:[#allocation0]]
  $region57: #{tpu_custom_call.1} parent=0
    _
  %s6 = ssub.s32 1, %s4
  %s7 = scalar_select 0, %s6, %s4
  $region1: #{tpu_custom_call.1} parent=0
    #allocation2 [shape = 'u8[8192]{0}', space=vmem, size = 0x2000, scoped, tag = 'input window, operand 0']
    #allocation3 [shape = 's32[2]{0}', space=sflag, size = 0x8, scoped, tag = 'scoped memory for tpu_custom_call.1']
    #allocation4 [shape = 's32[2]{0}', space=sflag, size = 0x8, scoped, tag = 'scoped memory for tpu_custom_call.1']
    #allocation5 [shape = 'u8[16384]{0}', space=vmem, size = 0x4000, scoped, tag = 'input window, operand 1, single buffered']
    #allocation6 [shape = 's32[1]{0}', space=sflag, size = 0x4, scoped, tag = 'scoped memory for tpu_custom_call.1']
    #allocation7 [shape = 'u8[512]{0}', space=vmem, size = 0x400, scoped, tag = 'input window, operand 2, single buffered']
    #allocation8 [shape = 'u8[8192]{0}', space=vmem, size = 0x2000, scoped, tag = 'output window, operand 0']
    %8 = vsyncpa [#allocation3], 0
    %s9 = scalar_lea.sflag [#allocation3], 1
    %10 = vsyncpa %s9, 0
    %11 = vsyncpa [#allocation6], 0
    %12 = vsyncpa [#allocation4], 0
    %s13 = scalar_lea.sflag [#allocation4], 1
    %14 = vsyncpa %s13, 0
    loop: start=0, step=1, limit=4
    $region2: #{tpu_custom_call.1} parent=1 // loop_pre_header
      _
    $region3: #{tpu_custom_call.1} parent=1 // loop_header
      %s16 = sphi 0, %s20
      %p17 = scmp.ge.s32.totalorder %s16, 4
      %s26 = sphi 0, %s28
      %s29 = sphi 0, %s26
      %s30 = sphi 0, %s29
      %s46 = sphi 0, %s30
      %s50 = sphi 0, %s50
      %s52 = sphi 0, %s50
      %s53 = sphi 0, %s52
      %s67 = sphi 0, %s53
      %s71 = sphi 0, %s71
      %s73 = sphi 0, %s71
      %s74 = sphi 0, %s73
      %s88 = sphi 0, %s74
      %s94 = sphi 0, %s96
      %s97 = sphi 0, %s94
      %s98 = sphi 0, %s97
      %s114 = sphi 0, %s98
    $region4: #{tpu_custom_call.1} parent=1 // loop_header_branch
      %19 = sbr.rel (%p17) target = $region8
    $region5: #{tpu_custom_call.1} parent=1 // loop_body
      %s21 = ssub.s32 %s16, 1
      %s22 = ssub.s32 %s16, 2
      %s23 = sadd.s32 %s16, 1
      %s24 = ssub.s32 %s16, %s23
      %p25 = scmp.eq.s32.totalorder %s24, 0
      %s27 = sadd.s32 %s26, 1
      %s28 = scalar_select %p25, %s26, %s27
      %p31 = pneg %p25
      %p32 = scmp.eq.s32.totalorder %s16, 1
      %p33 = por %p31, %p32
      %p34 = scmp.ne.s32.totalorder %s26, %s29
      %p35 = scmp.eq.s32.totalorder %s16, 0
      %p36 = por %p34, %p35
      %p37 = scmp.ne.s32.totalorder %s26, %s29
      %p38 = scmp.eq.s32.totalorder %s21, 1
      %p39 = por %p37, %p38
      %p40 = scmp.ne.s32.totalorder %s29, %s30
      %p41 = scmp.eq.s32.totalorder %s21, 0
      %p42 = por %p40, %p41
      %p43 = scmp.ne.s32.totalorder %s29, %s30
      %p44 = scmp.eq.s32.totalorder %s22, 1
      %p45 = por %p43, %p44
      %p47 = scmp.ne.s32.totalorder %s30, %s46
      %p48 = scmp.eq.s32.totalorder %s22, 0
      %p49 = por %p47, %p48
      %s51 = sadd.s32 %s50, 1
      %p54 = scmp.eq.s32.totalorder %s16, 1
      %p55 = scmp.ne.s32.totalorder %s50, %s52
      %p56 = scmp.eq.s32.totalorder %s16, 0
      %p57 = por %p55, %p56
      %p58 = scmp.ne.s32.totalorder %s50, %s52
      %p59 = scmp.eq.s32.totalorder %s21, 1
      %p60 = por %p58, %p59
      %p61 = scmp.ne.s32.totalorder %s52, %s53
      %p62 = scmp.eq.s32.totalorder %s21, 0
      %p63 = por %p61, %p62
      %p64 = scmp.ne.s32.totalorder %s52, %s53
      %p65 = scmp.eq.s32.totalorder %s22, 1
      %p66 = por %p64, %p65
      %p68 = scmp.ne.s32.totalorder %s53, %s67
      %p69 = scmp.eq.s32.totalorder %s22, 0
      %p70 = por %p68, %p69
      %s72 = sadd.s32 %s71, 1
      %p75 = scmp.eq.s32.totalorder %s16, 1
      %p76 = scmp.ne.s32.totalorder %s71, %s73
      %p77 = scmp.eq.s32.totalorder %s16, 0
      %p78 = por %p76, %p77
      %p79 = scmp.ne.s32.totalorder %s71, %s73
      %p80 = scmp.eq.s32.totalorder %s21, 1
      %p81 = por %p79, %p80
      %p82 = scmp.ne.s32.totalorder %s73, %s74
      %p83 = scmp.eq.s32.totalorder %s21, 0
      %p84 = por %p82, %p83
      %p85 = scmp.ne.s32.totalorder %s73, %s74
      %p86 = scmp.eq.s32.totalorder %s22, 1
      %p87 = por %p85, %p86
      %p89 = scmp.ne.s32.totalorder %s74, %s88
      %p90 = scmp.eq.s32.totalorder %s22, 0
      %p91 = por %p89, %p90
      %s92 = ssub.s32 %s16, %s23
      %p93 = scmp.eq.s32.totalorder %s92, 0
      %s95 = sadd.s32 %s94, 1
      %s96 = scalar_select %p93, %s94, %s95
      %p99 = pneg %p93
      %p100 = scmp.eq.s32.totalorder %s16, 1
      %p101 = por %p99, %p100
      %p102 = scmp.ne.s32.totalorder %s94, %s97
      %p103 = scmp.eq.s32.totalorder %s16, 0
      %p104 = por %p102, %p103
      %p105 = scmp.ne.s32.totalorder %s94, %s97
      %p106 = scmp.eq.s32.totalorder %s21, 1
      %p107 = por %p105, %p106
      %p108 = scmp.ne.s32.totalorder %s97, %s98
      %p109 = scmp.eq.s32.totalorder %s21, 0
      %p110 = por %p108, %p109
      %p111 = scmp.ne.s32.totalorder %s97, %s98
      %p112 = scmp.eq.s32.totalorder %s22, 1
      %p113 = por %p111, %p112
      %p115 = scmp.ne.s32.totalorder %s98, %s114
      %p116 = scmp.eq.s32.totalorder %s22, 0
      %p117 = por %p115, %p116
      %p118 = scmp.le.s32.totalorder 1, %s16
      %p119 = scmp.lt.s32.totalorder %s16, 3
      %p120 = pnand %p118, %p119
      %p121 = pneg %p120
      // Predicated region
      $region9: #{tpu_custom_call.1} parent=5 // pred_check
        _
      $region10: #{tpu_custom_call.1} parent=5 // pred_check_branch
        %123 = sbr.rel (%p120) target = $region12
      $region11: #{tpu_custom_call.1} parent=5 // pred_region
        %s124 = ssub.s32 %s16, 1
        // Predicated region
        $region13: #{tpu_custom_call.1} parent=11 // pred_check
          %p125 = pneg %p63
        $region14: #{tpu_custom_call.1} parent=11 // pred_check_branch
          %127 = sbr.rel (%p125) target = $region16
        $region15: #{tpu_custom_call.1} parent=11 // pred_region
          %s129 = ssub.s32 512, 512
          %130 = vsyncadd [#allocation6], %s129
          %s131 = sshll.u32 [#allocation5], 4
          %s132 = int_to_ptr.vmem [resolvable:$true] %s131
          %137 = dma.hbm_to_vmem [thread:$0]  %s1, 512, %s132, [#allocation6], 128, 128, 8
        $region16: #{tpu_custom_call.1} parent=11 // pred_fallthru
          _
        // Predicated region
        $region17: #{tpu_custom_call.1} parent=11 // pred_check
          %p138 = pneg %p84
        $region18: #{tpu_custom_call.1} parent=11 // pred_check_branch
          %140 = sbr.rel (%p138) target = $region20
        $region19: #{tpu_custom_call.1} parent=11 // pred_region
          %s142 = ssub.s32 16, 16
          %143 = vsyncadd [#allocation6], %s142
          %s145 = sshll.u32 [#allocation7], 4
          %s146 = int_to_ptr.vmem [resolvable:$true] %s145
          %148 = dma.hbm_to_vmem [thread:$0]  %s2, 16, %s146, [#allocation6]
        $region20: #{tpu_custom_call.1} parent=11 // pred_fallthru
          _
      $region12: #{tpu_custom_call.1} parent=5 // pred_fallthru
        _
      %p149 = scmp.lt.s32.totalorder %s16, 2
      // Predicated region
      $region21: #{tpu_custom_call.1} parent=5 // pred_check
        %p150 = pneg %p149
      $region22: #{tpu_custom_call.1} parent=5 // pred_check_branch
        %152 = sbr.rel (%p150) target = $region24
      $region23: #{tpu_custom_call.1} parent=5 // pred_region
        // Predicated region
        $region25: #{tpu_custom_call.1} parent=23 // pred_check
          %p153 = pneg %p36
        $region26: #{tpu_custom_call.1} parent=23 // pred_check_branch
          %155 = sbr.rel (%p153) target = $region28
        $region27: #{tpu_custom_call.1} parent=23 // pred_region
          %s156 = sand.u32 %s26, 1
          %s157 = scalar_lea.sflag [#allocation3], %s156
          %s158 = sand.u32 %s26, 1
          %s159 = smul.addr %s158, 8
          %s160 = scalar_lea.vmem [#allocation2], %s159
          %s162 = ssub.s32 128, 128
          %163 = vsyncadd %s157, %s162
          %s164 = smul.addr %s16, 128
          %s165 = scalar_lea.hbm %s0, %s164
          %s167 = sshll.u32 %s160, 4
          %s168 = int_to_ptr.vmem [resolvable:$true] %s167
          %170 = dma.hbm_to_vmem [thread:$0]  %s165, 128, %s168, %s157
        $region28: #{tpu_custom_call.1} parent=23 // pred_fallthru
          _
      $region24: #{tpu_custom_call.1} parent=5 // pred_fallthru
        _
      %p171 = scmp.le.s32.totalorder 1, %s16
      %p172 = scmp.lt.s32.totalorder %s16, 3
      %p173 = pnand %p171, %p172
      %p174 = pneg %p173
      // Predicated region
      $region29: #{tpu_custom_call.1} parent=5 // pred_check
        _
      $region30: #{tpu_custom_call.1} parent=5 // pred_check_branch
        %176 = sbr.rel (%p173) target = $region32
      $region31: #{tpu_custom_call.1} parent=5 // pred_region
        %s177 = ssub.s32 %s16, 1
        %s178 = sand.u32 %s29, 1
        %s179 = scalar_lea.sflag [#allocation3], %s178
        %s180 = sand.u32 %s29, 1
        %s181 = smul.addr %s180, 8
        %s182 = scalar_lea.vmem [#allocation2], %s181
        // Predicated region
        $region33: #{tpu_custom_call.1} parent=31 // pred_check
          %p183 = pneg %p42
        $region34: #{tpu_custom_call.1} parent=31 // pred_check_branch
          %185 = sbr.rel (%p183) target = $region36
        $region35: #{tpu_custom_call.1} parent=31 // pred_region
          %186 = dma.done %s179, 128
        $region36: #{tpu_custom_call.1} parent=31 // pred_fallthru
          _
        // Predicated region
        $region37: #{tpu_custom_call.1} parent=31 // pred_check
          %p187 = pneg %p63
        $region38: #{tpu_custom_call.1} parent=31 // pred_check_branch
          %189 = sbr.rel (%p187) target = $region40
        $region39: #{tpu_custom_call.1} parent=31 // pred_region
          %190 = dma.done [#allocation6], 512
        $region40: #{tpu_custom_call.1} parent=31 // pred_fallthru
          _
        // Predicated region
        $region41: #{tpu_custom_call.1} parent=31 // pred_check
          %p191 = pneg %p84
        $region42: #{tpu_custom_call.1} parent=31 // pred_check_branch
          %193 = sbr.rel (%p191) target = $region44
        $region43: #{tpu_custom_call.1} parent=31 // pred_region
          %194 = dma.done [#allocation6], 16
        $region44: #{tpu_custom_call.1} parent=31 // pred_fallthru
          _
        %s195 = sand.u32 %s29, 1
        %s196 = scalar_lea.sflag [#allocation3], %s195
        %s197 = sand.u32 %s29, 1
        %s198 = smul.addr %s197, 8
        %s199 = scalar_lea.vmem [#allocation2], %s198
        %p200 = pneg %p42
        %p201 = pneg %p39
        %p202 = pneg %p63
        %p203 = pneg %p60
        %p204 = pneg %p84
        %p205 = pneg %p81
        %p206 = pneg %p110
        %p207 = pneg %p107
        %s208 = sand.u32 %s97, 1
        %s209 = scalar_lea.sflag [#allocation4], %s208
        %s210 = sand.u32 %s97, 1
        %s211 = smul.addr %s210, 8
        %s212 = scalar_lea.vmem [#allocation8], %s211
        %v213 = vld [vmem:[%s182] sm:$0xff]
        %v214 = vmul.f32 %v213, %v213
        %vm215 = vcmask 261120
        %v216 = vsel %vm215, %v214, 0.0
        %217 = vadd.xlane.f32.xlu0 %v216
        %v218 = vpop.xlane.xlu0 %217
        %v219 = vrcp.pop 32.0
        %v220 = vmul.f32 %v218, %v219
        %v221 = vadd.f32 %v220, 1e-06
        %v222 = vrsqrt.pop %v221
        %v223 = vmul.f32 %v213, %v222
        %v224 = vld [vmem:[#allocation5] sm:$0xff]
        %v225 = vld [vmem:[#allocation5 + $0x8] sm:$0xff]
        %v226 = vld [vmem:[#allocation5 + $0x10] sm:$0xff]
        %v227 = vld [vmem:[#allocation5 + $0x18] sm:$0xff]
        %v228 = vld [vmem:[#allocation7] sm:$0x1]
        %v230 = vlaneseq
        %v231 = vshrl.u32 %v230, 7
        %v232 = vsub.s32 0, %v231
        %v233 = vrot.slane %v228, %v232
        %v236 = vsel %vm215, %v223, 0
        %238 = vmatprep.subr.mxu0 0.0
        %239 = vmatpush1.msra.mxu0 %v224
        %240 = vmatprep.subr.mxu0 0.0
        %241 = vmatpush1.msra.mxu0 %v225
        %242 = vmatprep.subr.mxu0 0.0
        %243 = vmatpush1.msra.mxu0 %v226
        %244 = vmatprep.subr.mxu0 0.0
        %245 = vmatpush1.msra.mxu0 %v227
        %246 = vmatprep.subr.mxu0 0.0
        %247 = vmatpush1.msra.mxu0 0.0
        %248 = vmatprep.subr.mxu0 0.0
        %249 = vmatpush1.msra.mxu0 0.0
        %250 = vmatprep.subr.mxu0 0.0
        %251 = vmatpush1.msra.mxu0 0.0
        %252 = vmatprep.subr.mxu0 0.0
        %253 = vmatpush1.msra.mxu0 0.0
        %254 = vmatprep.subr.mxu0 0.0
        %255 = vmatpush1.msra.mxu0 0.0
        %256 = vmatprep.subr.mxu0 0.0
        %257 = vmatpush1.msra.mxu0 0.0
        %258 = vmatprep.subr.mxu0 0.0
        %259 = vmatpush1.msra.mxu0 0.0
        %260 = vmatprep.subr.mxu0 0.0
        %261 = vmatpush1.msra.mxu0 0.0
        %262 = vmatprep.subr.mxu0 0.0
        %263 = vmatpush1.msra.mxu0 0.0
        %264 = vmatprep.subr.mxu0 0.0
        %265 = vmatpush1.msra.mxu0 0.0
        %266 = vmatprep.subr.mxu0 0.0
        %267 = vmatpush1.msra.mxu0 0.0
        %268 = vmatprep.subr.mxu0 0.0
        %269 = vmatpush1.msra.mxu0 0.0
        %270 = vmatprep.subr.mxu0 0.0
        %271 = vmatpush1.msra.mxu0 0.0
        %272 = vmatprep.subr.mxu0 0.0
        %273 = vmatpush1.msra.mxu0 0.0
        %274 = vmatprep.subr.mxu0 0.0
        %275 = vmatpush1.msra.mxu0 0.0
        %276 = vmatprep.subr.mxu0 0.0
        %277 = vmatpush1.msra.mxu0 0.0
        %278 = vmatprep.subr.mxu0 0.0
        %279 = vmatpush1.msra.mxu0 0.0
        %280 = vmatprep.subr.mxu0 0.0
        %281 = vmatpush1.msra.mxu0 0.0
        %282 = vmatprep.subr.mxu0 0.0
        %283 = vmatpush1.msra.mxu0 0.0
        %284 = vmatprep.subr.mxu0 0.0
        %285 = vmatpush1.msra.mxu0 0.0
        %286 = vmatprep.subr.mxu0 0.0
        %287 = vmatpush1.msra.mxu0 0.0
        %288 = vmatprep.subr.mxu0 0.0
        %289 = vmatpush1.msra.mxu0 0.0
        %290 = vmatprep.subr.mxu0 0.0
        %291 = vmatpush1.msra.mxu0 0.0
        %292 = vmatprep.subr.mxu0 0.0
        %293 = vmatpush1.msra.mxu0 0.0
        %294 = vmatprep.subr.mxu0 0.0
        %295 = vmatpush1.msra.mxu0 0.0
        %296 = vmatprep.subr.mxu0 0.0
        %297 = vmatpush1.msra.mxu0 0.0
        %298 = vmatprep.subr.mxu0 0.0
        %299 = vmatpush1.msra.mxu0 0.0
        %300 = vmatprep.subr.mxu0 0.0
        %301 = vmatpush1.msra.mxu0 0.0
        %302 = vmatprep.mubr.f32.mxu0 0.0
        %303 = vmatmul.mubr.f32.gmra.mrb[0].mxu0 %v236
        %v304 = vpop.f32.mrb[0].mxu0
        %v305 = vadd.f32 %v233, %v304
        %v306 = vpop.f32.mrb[0].mxu0
        %307 = vdwg.mxu0
        %308 = vst.msk [vmem:[%s212] sm:$0xff] %vm215, %v305
        %s309 = sand.u32 %s97, 1
        %s310 = scalar_lea.sflag [#allocation4], %s309
        %s311 = sand.u32 %s97, 1
        %s312 = smul.addr %s311, 8
        %s313 = scalar_lea.vmem [#allocation8], %s312
        // Predicated region
        $region45: #{tpu_custom_call.1} parent=31 // pred_check
          %p314 = pneg %p107
        $region46: #{tpu_custom_call.1} parent=31 // pred_check_branch
          %316 = sbr.rel (%p314) target = $region48
        $region47: #{tpu_custom_call.1} parent=31 // pred_region
          %s318 = ssub.s32 128, 128
          %319 = vsyncadd %s310, %s318
          %s320 = smul.addr %s21, 128
          %s321 = scalar_lea.hbm %s3, %s320
          %s323 = sshll.u32 %s313, 4
          %s324 = int_to_ptr.vmem [resolvable:$true] %s323
          %326 = dma.vmem_to_hbm [thread:$0]  %s324, 128, %s321, %s310
        $region48: #{tpu_custom_call.1} parent=31 // pred_fallthru
          _
      $region32: #{tpu_custom_call.1} parent=5 // pred_fallthru
        _
      %p327 = scmp.le.s32.totalorder 2, %s16
      // Predicated region
      $region49: #{tpu_custom_call.1} parent=5 // pred_check
        %p328 = pneg %p327
      $region50: #{tpu_custom_call.1} parent=5 // pred_check_branch
        %330 = sbr.rel (%p328) target = $region52
      $region51: #{tpu_custom_call.1} parent=5 // pred_region
        %s331 = ssub.s32 %s16, 2
        // Predicated region
        $region53: #{tpu_custom_call.1} parent=51 // pred_check
          %p332 = pneg %p113
        $region54: #{tpu_custom_call.1} parent=51 // pred_check_branch
          %334 = sbr.rel (%p332) target = $region56
        $region55: #{tpu_custom_call.1} parent=51 // pred_region
          %s335 = sand.u32 %s98, 1
          %s336 = scalar_lea.sflag [#allocation4], %s335
          %s337 = sand.u32 %s98, 1
          %s338 = smul.addr %s337, 8
          %s339 = scalar_lea.vmem [#allocation8], %s338
          %340 = dma.done %s336, 128
        $region56: #{tpu_custom_call.1} parent=51 // pred_fallthru
          _
      $region52: #{tpu_custom_call.1} parent=5 // pred_fallthru
        _
    $region6: #{tpu_custom_call.1} parent=1 // loop_footer
      %s20 = sadd.s32 1, %s16
    $region7: #{tpu_custom_call.1} parent=1 // loop_footer_branch
      %15 = sbr.rel target = $region3
    $region8: #{tpu_custom_call.1} parent=1 // loop_exit
      _
    %341 = vsyncpa [#allocation3], 1
    %s342 = scalar_lea.sflag [#allocation3], 1
    %343 = vsyncpa %s342, 1
    %344 = vsyncpa [#allocation6], 1
    %345 = vsyncpa [#allocation4], 1
    %s346 = scalar_lea.sflag [#allocation4], 1
    %347 = vsyncpa %s346, 1

</llo_original>
